<compile_context>
chip_gen: v5e
topology: v5e:2x2
jax: 0.10.0
libtpu: 0.0.40
codegen_flags: <defaults>
</compile_context>

<pallas_src>
import functools

import jax
import jax.numpy as jnp
from jax.experimental import pallas as pl
from jax.experimental.pallas import tpu as pltpu


def attention_kernel(query_ref, proj_key_ref, key_ref, wq_t_ref, we_ref,
                     ctx_ref, q_sc, m_sc, l_sc, acc_sc, *, n_valid, block_n):
    """One (batch block, N block) step of Bahdanau attention with online softmax.

    query_ref:    (block_b, H_pad)          decoder hidden state (zero-padded lanes)
    proj_key_ref: (block_b, block_n, H_pad) projected encoder keys (streamed over N)
    key_ref:      (block_b, block_n, H_pad) encoder keys (streamed over N)
    wq_t_ref:     (H_pad, H_pad)            query_layer.weight.T (zero-padded)
    we_ref:       (1, H_pad)                energy_layer.weight (zero-padded)
    ctx_ref:      (block_b, H_pad)          output context (written on last N step)
    q_sc:         (block_b, H_pad) f32      projected query (computed at ni == 0)
    m_sc, l_sc:   (block_b, 1)     f32      online-softmax running max / denominator
    acc_sc:       (block_b, H_pad) f32      running weighted sum of keys
    """
    ni = pl.program_id(1)

    @pl.when(ni == 0)
    def _init():
        # Query projection once per batch block; K = H_pad = 128 is MXU-aligned.
        q_sc[...] = jnp.dot(query_ref[...].astype(jnp.float32),
                            wq_t_ref[...].astype(jnp.float32),
                            preferred_element_type=jnp.float32)
        m_sc[...] = jnp.full_like(m_sc, -jnp.inf)
        l_sc[...] = jnp.zeros_like(l_sc)
        acc_sc[...] = jnp.zeros_like(acc_sc)

    proj_key = proj_key_ref[...].astype(jnp.float32)        # (bB, bN, Hp)
    key = key_ref[...].astype(jnp.float32)                   # (bB, bN, Hp)
    we = we_ref[...].astype(jnp.float32)                      # (1, Hp)

    # energy = tanh(q[:, None, :] + proj_key)   -- EUP tanh, lane-dense (128)
    energy = jnp.tanh(q_sc[...][:, None, :] + proj_key)       # (bB, bN, Hp)

    # scores = energy @ We^T -> (bB, bN). Output width would be 1 on the MXU,
    # so per the review we keep the VPU multiply + XLU lane reduce instead.
    scores = jnp.sum(energy * we[None, :, :], axis=2)          # (bB, bN)

    # Mask encoder positions that only exist because N was padded to a block
    # multiple (padded positions must not receive softmax mass).
    pos = ni * block_n + jax.lax.broadcasted_iota(jnp.int32, scores.shape, 1)
    scores = jnp.where(pos < n_valid, scores, -jnp.inf)

    # Online softmax update over the N axis.
    m_new = jnp.maximum(m_sc[...], jnp.max(scores, axis=1, keepdims=True))
    a = jnp.exp(m_sc[...] - m_new)                             # rescale factor
    p = jnp.exp(scores - m_new)                                # (bB, bN)
    l_sc[...] = a * l_sc[...] + jnp.sum(p, axis=1, keepdims=True)
    # Context update: broadcast-multiply + sublane reduce. At production
    # N (>= 128) this should become a batched dot_general onto the MXU.
    acc_sc[...] = a * acc_sc[...] + jnp.sum(p[:, :, None] * key, axis=1)
    m_sc[...] = m_new

    @pl.when(ni == pl.num_programs(1) - 1)
    def _finalize():
        inv_l = pl.reciprocal(l_sc[...], approx=True)          # EUP vrcp, free slot
        ctx_ref[...] = (acc_sc[...] * inv_l).astype(ctx_ref.dtype)


def attention_forward(query, proj_key, key, wq, we, *, block_b=8, block_n=8):
    """query (B,H), proj_key/key (B,N,H), wq (H,H) = query_layer.weight (out,in),
    we (1,H) = energy_layer.weight.  Returns context (B,H)."""
    B, H = query.shape
    _, N, _ = proj_key.shape

    # Lane-dense / block-aligned padded shapes (padding done in XLA, not in-kernel).
    H_pad = ((H + 127) // 128) * 128
    B_pad = ((B + block_b - 1) // block_b) * block_b
    N_pad = ((N + block_n - 1) // block_n) * block_n

    qz = jnp.zeros((B_pad, H_pad), query.dtype).at[:B, :H].set(query)
    pkz = jnp.zeros((B_pad, N_pad, H_pad), proj_key.dtype).at[:B, :N, :H].set(proj_key)
    kz = jnp.zeros((B_pad, N_pad, H_pad), key.dtype).at[:B, :N, :H].set(key)
    wq_t = jnp.zeros((H_pad, H_pad), wq.dtype).at[:H, :H].set(wq.T)
    wez = jnp.zeros((1, H_pad), we.dtype).at[:, :H].set(we)

    grid = (B_pad // block_b, N_pad // block_n)
    kernel = functools.partial(attention_kernel, n_valid=N, block_n=block_n)

    # Per-step streamed VMEM ~ 2 (dbl-buffer) * 2 (pk+key) * block_b*block_n*H_pad*4B
    # + resident weights/scratch -> keep well under v7x's 32 MiB scoped default.
    out = pl.pallas_call(
        kernel,
        out_shape=jax.ShapeDtypeStruct((B_pad, H_pad), query.dtype),
        grid_spec=pltpu.PrefetchScalarGridSpec(
            num_scalar_prefetch=0,
            grid=grid,
            in_specs=[
                pl.BlockSpec((block_b, H_pad), lambda bi, ni: (bi, 0)),          # query
                pl.BlockSpec((block_b, block_n, H_pad), lambda bi, ni: (bi, ni, 0)),  # proj_key
                pl.BlockSpec((block_b, block_n, H_pad), lambda bi, ni: (bi, ni, 0)),  # key
                pl.BlockSpec((H_pad, H_pad), lambda bi, ni: (0, 0)),              # Wq^T
                pl.BlockSpec((1, H_pad), lambda bi, ni: (0, 0)),                  # We
            ],
            out_specs=pl.BlockSpec((block_b, H_pad), lambda bi, ni: (bi, 0)),
            scratch_shapes=[
                pltpu.VMEM((block_b, H_pad), jnp.float32),  # projected query
                pltpu.VMEM((block_b, 1), jnp.float32),      # running max
                pltpu.VMEM((block_b, 1), jnp.float32),      # running denominator
                pltpu.VMEM((block_b, H_pad), jnp.float32),  # context accumulator
            ],
        ),
        compiler_params=pltpu.CompilerParams(
            dimension_semantics=("parallel", "arbitrary"),
        ),
    )(qz, pkz, kz, wq_t, wez)
    return out[:B, :H]


def attention_ref(query, proj_key, key, wq, we):
    """Pure-JAX reference mirroring the PyTorch forward exactly (all bias=False)."""
    q = query @ wq.T                                  # query_layer(query)
    energy = jnp.tanh(q[:, None, :] + proj_key)       # (B, N, H)
    scores = jnp.einsum("bnh,h->bn", energy, we[0])   # energy_layer -> (B, N)
    alphas = jax.nn.softmax(scores, axis=1)
    return jnp.einsum("bn,bnh->bh", alphas, key)      # bmm(alphas, key)


if __name__ == "__main__":
    B, N, H = 2, 8, 32
    root = jax.random.PRNGKey(0)
    k_q, k_pk, k_k, k_wq, k_we = jax.random.split(root, 5)

    # Inputs
    query = jax.random.normal(k_q, (B, H), dtype=jnp.float32)
    proj_key = jax.random.normal(k_pk, (B, N, H), dtype=jnp.float32)
    key = jax.random.normal(k_k, (B, N, H), dtype=jnp.float32)

    # Parameters (PyTorch-style uniform(-1/sqrt(H), 1/sqrt(H)); all bias=False).
    bound = 1.0 / (H ** 0.5)
    wq = jax.random.uniform(k_wq, (H, H), minval=-bound, maxval=bound,
                            dtype=jnp.float32)   # query_layer.weight (out, in)
    we = jax.random.uniform(k_we, (1, H), minval=-bound, maxval=bound,
                            dtype=jnp.float32)   # energy_layer.weight (1, H)
    # key_layer.weight exists in the module but is never used in forward().

    out = attention_forward(query, proj_key, key, wq, we)
    out = jax.block_until_ready(out)

    ref = attention_ref(query, proj_key, key, wq, we)
    assert out.shape == (B, H)
    # Loose tolerance: the softmax normalize uses the approximate EUP
    # reciprocal (pl.reciprocal(approx=True)), which perturbs low-order bits.
    err = float(jnp.max(jnp.abs(out - ref)))
    assert jnp.allclose(out, ref, atol=1e-2, rtol=1e-2), f"mismatch vs reference, max abs err {err}"

    print("KERNEL_OK")
</pallas_src>

<mosaic_0001>
module attributes {stable_mosaic.version = 11 : i64} {
  func.func @attention_kernel(%arg0: i32, %arg1: i32, %arg2: memref<8x128xf32, #tpu.memory_space<vmem>>, %arg3: memref<8x8x128xf32, #tpu.memory_space<vmem>>, %arg4: memref<8x8x128xf32, #tpu.memory_space<vmem>>, %arg5: memref<128x128xf32, #tpu.memory_space<vmem>>, %arg6: memref<1x128xf32, #tpu.memory_space<vmem>>, %arg7: memref<8x128xf32, #tpu.memory_space<vmem>>, %arg8: memref<8x128xf32, #tpu.memory_space<vmem>>, %arg9: memref<8x1xf32, #tpu.memory_space<vmem>>, %arg10: memref<8x1xf32, #tpu.memory_space<vmem>>, %arg11: memref<8x128xf32, #tpu.memory_space<vmem>>) attributes {dimension_semantics = [#tpu.dimension_semantics<parallel>, #tpu.dimension_semantics<arbitrary>], iteration_bounds = array<i64: 1, 1>, scalar_prefetch = 0 : i64, scratch_operands = 4 : i64, tpu.core_type = #tpu.core_type<tc>, window_params = [{transform_indices = @transform_0, window_bounds = array<i64: 8, 128>}, {transform_indices = @transform_1, window_bounds = array<i64: 8, 8, 128>}, {transform_indices = @transform_2, window_bounds = array<i64: 8, 8, 128>}, {pipeline_mode = #tpu.pipeline_mode<synchronous>, transform_indices = @transform_3, window_bounds = array<i64: 128, 128>}, {pipeline_mode = #tpu.pipeline_mode<synchronous>, transform_indices = @transform_4, window_bounds = array<i64: 1, 128>}, {transform_indices = @transform_5, window_bounds = array<i64: 8, 128>}]} {
    %c0_i32 = arith.constant 0 : i32
    %0 = arith.cmpi eq, %arg1, %c0_i32 : i32
    %1 = arith.extui %0 : i1 to i32
    %c0_i32_0 = arith.constant 0 : i32
    %2 = arith.cmpi ne, %1, %c0_i32_0 : i32
    scf.if %2 {
      %c0_31 = arith.constant 0 : index
      %c0_32 = arith.constant 0 : index
      %52 = vector.load %arg2[%c0_31, %c0_32] : memref<8x128xf32, #tpu.memory_space<vmem>>, vector<8x128xf32>
      %c0_33 = arith.constant 0 : index
      %c0_34 = arith.constant 0 : index
      %53 = vector.load %arg5[%c0_33, %c0_34] : memref<128x128xf32, #tpu.memory_space<vmem>>, vector<128x128xf32>
      %cst_35 = arith.constant dense<0.000000e+00> : vector<8x128xf32>
      %54 = tpu.matmul %52, %53, %cst_35 {dimension_numbers = #tpu.dot_dimension_numbers<[1], [0], [0], [1], [0, 0, 1, 1], [], []>} : vector<8x128xf32>, vector<128x128xf32>, vector<8x128xf32> -> vector<8x128xf32>
      %c0_36 = arith.constant 0 : index
      %c0_37 = arith.constant 0 : index
      %55 = vector.load %arg8[%c0_36, %c0_37] : memref<8x128xf32, #tpu.memory_space<vmem>>, vector<8x128xf32>
      tpu.vector_store %arg8[%c0_36, %c0_37], %54 {strides = array<i32>} : memref<8x128xf32, #tpu.memory_space<vmem>>, vector<8x128xf32>,
      %cst_38 = arith.constant 0xFF800000 : f32
      %56 = vector.broadcast %cst_38 : f32 to vector<8x1xf32>
      %c0_39 = arith.constant 0 : index
      %c0_40 = arith.constant 0 : index
      %57 = vector.load %arg9[%c0_39, %c0_40] : memref<8x1xf32, #tpu.memory_space<vmem>>, vector<8x1xf32>
      tpu.vector_store %arg9[%c0_39, %c0_40], %56 {strides = array<i32>} : memref<8x1xf32, #tpu.memory_space<vmem>>, vector<8x1xf32>,
      %cst_41 = arith.constant 0.000000e+00 : f32
      %58 = vector.broadcast %cst_41 : f32 to vector<8x1xf32>
      %c0_42 = arith.constant 0 : index
      %c0_43 = arith.constant 0 : index
      %59 = vector.load %arg10[%c0_42, %c0_43] : memref<8x1xf32, #tpu.memory_space<vmem>>, vector<8x1xf32>
      tpu.vector_store %arg10[%c0_42, %c0_43], %58 {strides = array<i32>} : memref<8x1xf32, #tpu.memory_space<vmem>>, vector<8x1xf32>,
      %cst_44 = arith.constant 0.000000e+00 : f32
      %60 = vector.broadcast %cst_44 : f32 to vector<8x128xf32>
      %c0_45 = arith.constant 0 : index
      %c0_46 = arith.constant 0 : index
      %61 = vector.load %arg11[%c0_45, %c0_46] : memref<8x128xf32, #tpu.memory_space<vmem>>, vector<8x128xf32>
      tpu.vector_store %arg11[%c0_45, %c0_46], %60 {strides = array<i32>} : memref<8x128xf32, #tpu.memory_space<vmem>>, vector<8x128xf32>,
    } else {
    }
    %c0 = arith.constant 0 : index
    %c0_1 = arith.constant 0 : index
    %c0_2 = arith.constant 0 : index
    %3 = vector.load %arg3[%c0, %c0_1, %c0_2] : memref<8x8x128xf32, #tpu.memory_space<vmem>>, vector<8x8x128xf32>
    %c0_3 = arith.constant 0 : index
    %c0_4 = arith.constant 0 : index
    %c0_5 = arith.constant 0 : index
    %4 = vector.load %arg4[%c0_3, %c0_4, %c0_5] : memref<8x8x128xf32, #tpu.memory_space<vmem>>, vector<8x8x128xf32>
    %c0_6 = arith.constant 0 : index
    %c0_7 = arith.constant 0 : index
    %5 = vector.load %arg6[%c0_6, %c0_7] : memref<1x128xf32, #tpu.memory_space<vmem>>, vector<1x128xf32>
    %c0_8 = arith.constant 0 : index
    %c0_9 = arith.constant 0 : index
    %6 = vector.load %arg8[%c0_8, %c0_9] : memref<8x128xf32, #tpu.memory_space<vmem>>, vector<8x128xf32>
    %7 = vector.shape_cast %6 : vector<8x128xf32> to vector<8x1x128xf32>
    %8 = vector.broadcast %7 : vector<8x1x128xf32> to vector<8x8x128xf32>
    %9 = arith.addf %8, %3 : vector<8x8x128xf32>
    %10 = math.tanh %9 : vector<8x8x128xf32>
    %11 = vector.shape_cast %5 : vector<1x128xf32> to vector<1x1x128xf32>
    %12 = vector.broadcast %11 : vector<1x1x128xf32> to vector<8x8x128xf32>
    %13 = arith.mulf %10, %12 : vector<8x8x128xf32>
    %cst = arith.constant dense<0.000000e+00> : vector<8x8xf32>
    %14 = vector.multi_reduction <add>, %13, %cst [2] : vector<8x8x128xf32> to vector<8x8xf32>
    %c8_i32 = arith.constant 8 : i32
    %15 = arith.muli %arg1, %c8_i32 : i32
    %16 = tpu.iota {dimensions = array<i32: 1>} : vector<8x8xi32>
    %17 = vector.broadcast %15 : i32 to vector<8x8xi32>
    %18 = arith.addi %17, %16 : vector<8x8xi32>
    %c8_i32_10 = arith.constant 8 : i32
    %19 = vector.broadcast %c8_i32_10 : i32 to vector<8x8xi32>
    %20 = arith.cmpi slt, %18, %19 : vector<8x8xi32>
    %cst_11 = arith.constant 0xFF800000 : f32
    %21 = vector.broadcast %cst_11 : f32 to vector<8x8xf32>
    %22 = arith.select %20, %14, %21 : vector<8x8xi1>, vector<8x8xf32>
    %c0_12 = arith.constant 0 : index
    %c0_13 = arith.constant 0 : index
    %23 = vector.load %arg9[%c0_12, %c0_13] : memref<8x1xf32, #tpu.memory_space<vmem>>, vector<8x1xf32>
    %cst_14 = arith.constant dense<0xFF800000> : vector<8xf32>
    %24 = vector.multi_reduction <maximumf>, %22, %cst_14 [1] : vector<8x8xf32> to vector<8xf32>
    %25 = vector.shape_cast %24 : vector<8xf32> to vector<8x1xf32>
    %26 = arith.maximumf %23, %25 : vector<8x1xf32>
    %c0_15 = arith.constant 0 : index
    %c0_16 = arith.constant 0 : index
    %27 = vector.load %arg9[%c0_15, %c0_16] : memref<8x1xf32, #tpu.memory_space<vmem>>, vector<8x1xf32>
    %28 = arith.subf %27, %26 : vector<8x1xf32>
    %29 = math.exp %28 : vector<8x1xf32>
    %30 = vector.broadcast %26 : vector<8x1xf32> to vector<8x8xf32>
    %31 = arith.subf %22, %30 : vector<8x8xf32>
    %32 = math.exp %31 : vector<8x8xf32>
    %c0_17 = arith.constant 0 : index
    %c0_18 = arith.constant 0 : index
    %33 = vector.load %arg10[%c0_17, %c0_18] : memref<8x1xf32, #tpu.memory_space<vmem>>, vector<8x1xf32>
    %34 = arith.mulf %29, %33 : vector<8x1xf32>
    %cst_19 = arith.constant dense<0.000000e+00> : vector<8xf32>
    %35 = vector.multi_reduction <add>, %32, %cst_19 [1] : vector<8x8xf32> to vector<8xf32>
    %36 = vector.shape_cast %35 : vector<8xf32> to vector<8x1xf32>
    %37 = arith.addf %34, %36 : vector<8x1xf32>
    %c0_20 = arith.constant 0 : index
    %c0_21 = arith.constant 0 : index
    %38 = vector.load %arg10[%c0_20, %c0_21] : memref<8x1xf32, #tpu.memory_space<vmem>>, vector<8x1xf32>
    tpu.vector_store %arg10[%c0_20, %c0_21], %37 {strides = array<i32>} : memref<8x1xf32, #tpu.memory_space<vmem>>, vector<8x1xf32>,
    %c0_22 = arith.constant 0 : index
    %c0_23 = arith.constant 0 : index
    %39 = vector.load %arg11[%c0_22, %c0_23] : memref<8x128xf32, #tpu.memory_space<vmem>>, vector<8x128xf32>
    %40 = vector.broadcast %29 : vector<8x1xf32> to vector<8x128xf32>
    %41 = arith.mulf %40, %39 : vector<8x128xf32>
    %42 = vector.shape_cast %32 : vector<8x8xf32> to vector<8x8x1xf32>
    %43 = vector.broadcast %42 : vector<8x8x1xf32> to vector<8x8x128xf32>
    %44 = arith.mulf %43, %4 : vector<8x8x128xf32>
    %cst_24 = arith.constant dense<0.000000e+00> : vector<8x128xf32>
    %45 = vector.multi_reduction <add>, %44, %cst_24 [1] : vector<8x8x128xf32> to vector<8x128xf32>
    %46 = arith.addf %41, %45 : vector<8x128xf32>
    %c0_25 = arith.constant 0 : index
    %c0_26 = arith.constant 0 : index
    %47 = vector.load %arg11[%c0_25, %c0_26] : memref<8x128xf32, #tpu.memory_space<vmem>>, vector<8x128xf32>
    tpu.vector_store %arg11[%c0_25, %c0_26], %46 {strides = array<i32>} : memref<8x128xf32, #tpu.memory_space<vmem>>, vector<8x128xf32>,
    %c0_27 = arith.constant 0 : index
    %c0_28 = arith.constant 0 : index
    %48 = vector.load %arg9[%c0_27, %c0_28] : memref<8x1xf32, #tpu.memory_space<vmem>>, vector<8x1xf32>
    tpu.vector_store %arg9[%c0_27, %c0_28], %26 {strides = array<i32>} : memref<8x1xf32, #tpu.memory_space<vmem>>, vector<8x1xf32>,
    %c0_i32_29 = arith.constant 0 : i32
    %49 = arith.cmpi eq, %arg1, %c0_i32_29 : i32
    %50 = arith.extui %49 : i1 to i32
    %c0_i32_30 = arith.constant 0 : i32
    %51 = arith.cmpi ne, %50, %c0_i32_30 : i32
    scf.if %51 {
      %c0_31 = arith.constant 0 : index
      %c0_32 = arith.constant 0 : index
      %52 = vector.load %arg10[%c0_31, %c0_32] : memref<8x1xf32, #tpu.memory_space<vmem>>, vector<8x1xf32>
      %53 = tpu.reciprocal %52 {approx = true} : vector<8x1xf32> -> vector<8x1xf32>
      %c0_33 = arith.constant 0 : index
      %c0_34 = arith.constant 0 : index
      %54 = vector.load %arg11[%c0_33, %c0_34] : memref<8x128xf32, #tpu.memory_space<vmem>>, vector<8x128xf32>
      %55 = vector.broadcast %53 : vector<8x1xf32> to vector<8x128xf32>
      %56 = arith.mulf %54, %55 : vector<8x128xf32>
      %c0_35 = arith.constant 0 : index
      %c0_36 = arith.constant 0 : index
      %57 = vector.load %arg7[%c0_35, %c0_36] : memref<8x128xf32, #tpu.memory_space<vmem>>, vector<8x128xf32>
      tpu.vector_store %arg7[%c0_35, %c0_36], %56 {strides = array<i32>} : memref<8x128xf32, #tpu.memory_space<vmem>>, vector<8x128xf32>,
    } else {
    }
    return
  }
  func.func @transform_0(%arg0: i32, %arg1: i32) -> (i32, i32) {
    %c0_i32 = arith.constant 0 : i32
    %c0_i32_0 = arith.constant 0 : i32
    return %arg0, %c0_i32 : i32, i32
  }
  func.func @transform_1(%arg0: i32, %arg1: i32) -> (i32, i32, i32) {
    %c0_i32 = arith.constant 0 : i32
    %c0_i32_0 = arith.constant 0 : i32
    return %arg0, %arg1, %c0_i32 : i32, i32, i32
  }
  func.func @transform_2(%arg0: i32, %arg1: i32) -> (i32, i32, i32) {
    %c0_i32 = arith.constant 0 : i32
    %c0_i32_0 = arith.constant 0 : i32
    return %arg0, %arg1, %c0_i32 : i32, i32, i32
  }
  func.func @transform_3(%arg0: i32, %arg1: i32) -> (i32, i32) {
    %c0_i32 = arith.constant 0 : i32
    %c0_i32_0 = arith.constant 0 : i32
    %c0_i32_1 = arith.constant 0 : i32
    return %c0_i32, %c0_i32_0 : i32, i32
  }
  func.func @transform_4(%arg0: i32, %arg1: i32) -> (i32, i32) {
    %c0_i32 = arith.constant 0 : i32
    %c0_i32_0 = arith.constant 0 : i32
    %c0_i32_1 = arith.constant 0 : i32
    return %c0_i32, %c0_i32_0 : i32, i32
  }
  func.func @transform_5(%arg0: i32, %arg1: i32) -> (i32, i32) {
    %c0_i32 = arith.constant 0 : i32
    %c0_i32_0 = arith.constant 0 : i32
    return %arg0, %c0_i32 : i32, i32
  }
}

</mosaic_0001>

<llo_original>
// kernel: tpu_custom_call.1
$region0: #{tpu_custom_call.1}
  #allocation0 [shape = 'u32[]', space=smem, size = 0x4, offset = 0x4, fixed_abs, tag = 'smem constant byte address 0x4 - core index']
  #allocation1 [shape = 'u32[72,128]{1,0:T(1,128)}', space=vmem, size = 0x9000, scoped, tag = 'internal scratch']
  #allocation2 [shape = 'f32[8,128]{1,0:T(8,128)}', space=vmem, size = 0x1000, scoped, tag = 'scratch operand']
  #allocation3 [shape = 'f32[8,1]{1,0:T(8,128)}', space=vmem, size = 0x1000, scoped, tag = 'scratch operand']
  #allocation4 [shape = 'f32[8,1]{1,0:T(8,128)}', space=vmem, size = 0x1000, scoped, tag = 'scratch operand']
  #allocation5 [shape = 'f32[8,128]{1,0:T(8,128)}', space=vmem, size = 0x1000, scoped, tag = 'scratch operand']
  %s0 = inlined_call_operand.hbm [shape: f32[8,128], index: 0, kind: input, shape index: {}]
  %s1 = inlined_call_operand.hbm [shape: f32[8,8,128], index: 1, kind: input, shape index: {}]
  %s2 = inlined_call_operand.hbm [shape: f32[8,8,128], index: 2, kind: input, shape index: {}]
  %s3 = inlined_call_operand.hbm [shape: f32[128,128], index: 3, kind: input, shape index: {}]
  %s4 = inlined_call_operand.vmem [shape: f32[1,128], index: 4, kind: input, shape index: {}]
  %s5 = inlined_call_operand.hbm [shape: f32[8,128], index: 5, kind: output, shape index: {}]
  %s6 = sld [smem:[#allocation0]]
  $region54: #{tpu_custom_call.1} parent=0
    _
  %s8 = ssub.s32 1, %s6
  %s9 = scalar_select 0, %s8, %s6
  $region1: #{tpu_custom_call.1} parent=0
    #allocation6 [shape = 'u8[4096]{0}', space=vmem, size = 0x1000, scoped, tag = 'input window, operand 0, single buffered']
    #allocation7 [shape = 's32[1]{0}', space=sflag, size = 0x4, scoped, tag = 'scoped memory for tpu_custom_call.1']
    #allocation8 [shape = 's32[1]{0}', space=sflag, size = 0x4, scoped, tag = 'scoped memory for tpu_custom_call.1']
    #allocation9 [shape = 'u8[32768]{0}', space=vmem, size = 0x8000, scoped, tag = 'input window, operand 1, single buffered']
    #allocation10 [shape = 's32[1]{0}', space=sflag, size = 0x4, scoped, tag = 'scoped memory for tpu_custom_call.1']
    #allocation11 [shape = 'u8[32768]{0}', space=vmem, size = 0x8000, scoped, tag = 'input window, operand 2, single buffered']
    #allocation12 [shape = 'u8[65536]{0}', space=vmem, size = 0x10000, scoped, tag = 'input window, operand 3, single buffered']
    #allocation13 [shape = 's32[1]{0}', space=sflag, size = 0x4, scoped, tag = 'scoped memory for tpu_custom_call.1']
    #allocation14 [shape = 'u8[4096]{0}', space=vmem, size = 0x1000, scoped, tag = 'output window, operand 0, single buffered']
    %10 = vsyncpa [#allocation7], 0
    %11 = vsyncpa [#allocation10], 0
    %12 = vsyncpa [#allocation13], 0
    %13 = vsyncpa [#allocation8], 0
    // Predicated region
    $region2: #{tpu_custom_call.1} parent=1 // pred_check
      _
    $region3: #{tpu_custom_call.1} parent=1 // pred_check_branch
      %15 = sbr.rel (0) target = $region5
    $region4: #{tpu_custom_call.1} parent=1 // pred_region
      %17 = vsyncadd [#allocation7], 0
      %s19 = sshll.u32 %s0, 4
      %s20 = int_to_ptr.hbm [resolvable:$true] %s19
      %s21 = sshll.u32 [#allocation6], 4
      %s22 = int_to_ptr.vmem [resolvable:$true] %s21
      %24 = dma.hbm_to_vmem [thread:$0]  %s20, 128, %s22, [#allocation7]
    $region5: #{tpu_custom_call.1} parent=1 // pred_fallthru
      _
    // Predicated region
    $region6: #{tpu_custom_call.1} parent=1 // pred_check
      _
    $region7: #{tpu_custom_call.1} parent=1 // pred_check_branch
      %26 = sbr.rel (0) target = $region9
    $region8: #{tpu_custom_call.1} parent=1 // pred_region
      %28 = vsyncadd [#allocation10], 0
      %s29 = sshll.u32 %s1, 4
      %s30 = int_to_ptr.hbm [resolvable:$true] %s29
      %s31 = sshll.u32 [#allocation9], 4
      %s32 = int_to_ptr.vmem [resolvable:$true] %s31
      %37 = dma.hbm_to_vmem [thread:$0]  %s30, 1024, %s32, [#allocation10], 128, 128, 8
    $region9: #{tpu_custom_call.1} parent=1 // pred_fallthru
      _
    // Predicated region
    $region10: #{tpu_custom_call.1} parent=1 // pred_check
      _
    $region11: #{tpu_custom_call.1} parent=1 // pred_check_branch
      %39 = sbr.rel (0) target = $region13
    $region12: #{tpu_custom_call.1} parent=1 // pred_region
      %41 = vsyncadd [#allocation10], 0
      %s42 = sshll.u32 %s2, 4
      %s43 = int_to_ptr.hbm [resolvable:$true] %s42
      %s44 = sshll.u32 [#allocation11], 4
      %s45 = int_to_ptr.vmem [resolvable:$true] %s44
      %50 = dma.hbm_to_vmem [thread:$0]  %s43, 1024, %s45, [#allocation10], 128, 128, 8
    $region13: #{tpu_custom_call.1} parent=1 // pred_fallthru
      _
    // Predicated region
    $region14: #{tpu_custom_call.1} parent=1 // pred_check
      _
    $region15: #{tpu_custom_call.1} parent=1 // pred_check_branch
      %52 = sbr.rel (0) target = $region17
    $region16: #{tpu_custom_call.1} parent=1 // pred_region
      %54 = vsyncadd [#allocation13], 0
      %s55 = sshll.u32 %s3, 4
      %s56 = int_to_ptr.hbm [resolvable:$true] %s55
      %s57 = sshll.u32 [#allocation12], 4
      %s58 = int_to_ptr.vmem [resolvable:$true] %s57
      %63 = dma.hbm_to_vmem [thread:$0]  %s56, 2048, %s58, [#allocation13], 128, 128, 8
    $region17: #{tpu_custom_call.1} parent=1 // pred_fallthru
      _
    // Predicated region
    $region18: #{tpu_custom_call.1} parent=1 // pred_check
      _
    $region19: #{tpu_custom_call.1} parent=1 // pred_check_branch
      %65 = sbr.rel (0) target = $region21
    $region20: #{tpu_custom_call.1} parent=1 // pred_region
      _
    $region21: #{tpu_custom_call.1} parent=1 // pred_fallthru
      _
    // Predicated region
    $region22: #{tpu_custom_call.1} parent=1 // pred_check
      _
    $region23: #{tpu_custom_call.1} parent=1 // pred_check_branch
      %67 = sbr.rel (0) target = $region25
    $region24: #{tpu_custom_call.1} parent=1 // pred_region
      %69 = dma.done [#allocation7], 128
    $region25: #{tpu_custom_call.1} parent=1 // pred_fallthru
      _
    // Predicated region
    $region26: #{tpu_custom_call.1} parent=1 // pred_check
      _
    $region27: #{tpu_custom_call.1} parent=1 // pred_check_branch
      %71 = sbr.rel (0) target = $region29
    $region28: #{tpu_custom_call.1} parent=1 // pred_region
      %73 = dma.done [#allocation10], 1024
    $region29: #{tpu_custom_call.1} parent=1 // pred_fallthru
      _
    // Predicated region
    $region30: #{tpu_custom_call.1} parent=1 // pred_check
      _
    $region31: #{tpu_custom_call.1} parent=1 // pred_check_branch
      %75 = sbr.rel (0) target = $region33
    $region32: #{tpu_custom_call.1} parent=1 // pred_region
      %77 = dma.done [#allocation10], 1024
    $region33: #{tpu_custom_call.1} parent=1 // pred_fallthru
      _
    // Predicated region
    $region34: #{tpu_custom_call.1} parent=1 // pred_check
      _
    $region35: #{tpu_custom_call.1} parent=1 // pred_check_branch
      %79 = sbr.rel (0) target = $region37
    $region36: #{tpu_custom_call.1} parent=1 // pred_region
      %81 = dma.done [#allocation13], 2048
    $region37: #{tpu_custom_call.1} parent=1 // pred_fallthru
      _
    %p82 = scmp.eq.s32.totalorder 0, 0
    // Predicated region
    $region38: #{tpu_custom_call.1} parent=1 // pred_check
      %p83 = pneg %p82
    $region39: #{tpu_custom_call.1} parent=1 // pred_check_branch
      %85 = sbr.rel (%p83) target = $region41
    $region40: #{tpu_custom_call.1} parent=1 // pred_region
      %v86 = vld [vmem:[#allocation6] sm:$0xff]
      %v87 = vld [vmem:[#allocation12] sm:$0xff]
      %v88 = vld [vmem:[#allocation12 + $0x8] sm:$0xff]
      %v89 = vld [vmem:[#allocation12 + $0x10] sm:$0xff]
      %v90 = vld [vmem:[#allocation12 + $0x18] sm:$0xff]
      %v91 = vld [vmem:[#allocation12 + $0x20] sm:$0xff]
      %v92 = vld [vmem:[#allocation12 + $0x28] sm:$0xff]
      %v93 = vld [vmem:[#allocation12 + $0x30] sm:$0xff]
      %v94 = vld [vmem:[#allocation12 + $0x38] sm:$0xff]
      %v95 = vld [vmem:[#allocation12 + $0x40] sm:$0xff]
      %v96 = vld [vmem:[#allocation12 + $0x48] sm:$0xff]
      %v97 = vld [vmem:[#allocation12 + $0x50] sm:$0xff]
      %v98 = vld [vmem:[#allocation12 + $0x58] sm:$0xff]
      %v99 = vld [vmem:[#allocation12 + $0x60] sm:$0xff]
      %v100 = vld [vmem:[#allocation12 + $0x68] sm:$0xff]
      %v101 = vld [vmem:[#allocation12 + $0x70] sm:$0xff]
      %v102 = vld [vmem:[#allocation12 + $0x78] sm:$0xff]
      %103 = vmatpush.msra.mxu0 %v102
      %104 = vmatpush.msra.mxu0 %v101
      %105 = vmatpush.msra.mxu0 %v100
      %106 = vmatpush.msra.mxu0 %v99
      %107 = vmatpush.msra.mxu0 %v98
      %108 = vmatpush.msra.mxu0 %v97
      %109 = vmatpush.msra.mxu0 %v96
      %110 = vmatpush.msra.mxu0 %v95
      %111 = vmatpush.msra.mxu0 %v94
      %112 = vmatpush.msra.mxu0 %v93
      %113 = vmatpush.msra.mxu0 %v92
      %114 = vmatpush.msra.mxu0 %v91
      %115 = vmatpush.msra.mxu0 %v90
      %116 = vmatpush.msra.mxu0 %v89
      %117 = vmatpush.msra.mxu0 %v88
      %118 = vmatpush.msra.mxu0 %v87
      %119 = vmatmul.f32.gmra.mxu0 %v86
      %v120 = vpop.f32.mrf.mxu0
      %v121 = vadd.f32 0.0, %v120
      %122 = vdwg.mxu0
      %123 = vst [vmem:[#allocation2] sm:$0xff] %v121
      %vm124 = vcmask 7168
      %125 = vst.msk [vmem:[#allocation3] sm:$0xff] %vm124, -inf
      %126 = vst.msk [vmem:[#allocation4] sm:$0xff] %vm124, 0.0
      %127 = vst [vmem:[#allocation5] sm:$0xff] 0.0
    $region41: #{tpu_custom_call.1} parent=1 // pred_fallthru
      _
    %v128 = vld [vmem:[#allocation9] sm:$0xff]
    %v129 = vld [vmem:[#allocation9 + $0x8] sm:$0xff]
    %v130 = vld [vmem:[#allocation9 + $0x10] sm:$0xff]
    %v131 = vld [vmem:[#allocation9 + $0x18] sm:$0xff]
    %v132 = vld [vmem:[#allocation9 + $0x20] sm:$0xff]
    %v133 = vld [vmem:[#allocation9 + $0x28] sm:$0xff]
    %v134 = vld [vmem:[#allocation9 + $0x30] sm:$0xff]
    %v135 = vld [vmem:[#allocation9 + $0x38] sm:$0xff]
    %v136 = vld [vmem:[#allocation11] sm:$0xff]
    %v137 = vld [vmem:[#allocation11 + $0x8] sm:$0xff]
    %v138 = vld [vmem:[#allocation11 + $0x10] sm:$0xff]
    %v139 = vld [vmem:[#allocation11 + $0x18] sm:$0xff]
    %v140 = vld [vmem:[#allocation11 + $0x20] sm:$0xff]
    %v141 = vld [vmem:[#allocation11 + $0x28] sm:$0xff]
    %v142 = vld [vmem:[#allocation11 + $0x30] sm:$0xff]
    %v143 = vld [vmem:[#allocation11 + $0x38] sm:$0xff]
    %v144 = vld [vmem:[%s4] sm:$0x1]
    %v145 = vld [vmem:[#allocation2] sm:$0xff]
    %v147 = vrot.slane %v145, 1
    %v148 = vrot.slane %v145, 2
    %v149 = vrot.slane %v145, 3
    %v150 = vrot.slane %v145, 4
    %v151 = vrot.slane %v145, 5
    %v152 = vrot.slane %v145, 6
    %v153 = vrot.slane %v145, 7
    %v154 = vperm.slane %v145, 0
    %v155 = vperm.slane %v147, 0
    %v156 = vperm.slane %v148, 0
    %v157 = vperm.slane %v149, 0
    %v158 = vperm.slane %v150, 0
    %v159 = vperm.slane %v151, 0
    %v160 = vperm.slane %v152, 0
    %v161 = vperm.slane %v153, 0
    %v170 = vadd.f32 %v154, %v128
    %v171 = vadd.f32 %v155, %v129
    %v172 = vadd.f32 %v156, %v130
    %v173 = vadd.f32 %v157, %v131
    %v174 = vadd.f32 %v158, %v132
    %v175 = vadd.f32 %v159, %v133
    %v176 = vadd.f32 %v160, %v134
    %v177 = vadd.f32 %v161, %v135
    %v178 = vtanh.pop %v170
    %v179 = vtanh.pop %v171
    %v180 = vtanh.pop %v172
    %v181 = vtanh.pop %v173
    %v182 = vtanh.pop %v174
    %v183 = vtanh.pop %v175
    %v184 = vtanh.pop %v176
    %v185 = vtanh.pop %v177
    %v187 = vperm.slane %v144, 0
    %v189 = vmul.f32 %v178, %v187
    %v190 = vmul.f32 %v179, %v187
    %v191 = vmul.f32 %v180, %v187
    %v192 = vmul.f32 %v181, %v187
    %v193 = vmul.f32 %v182, %v187
    %v194 = vmul.f32 %v183, %v187
    %v195 = vmul.f32 %v184, %v187
    %v196 = vmul.f32 %v185, %v187
    %197 = vadd.xlane.f32.xlu0 %v189
    %v198 = vpop.xlane.xlu0 %197
    %199 = vadd.xlane.f32.xlu0 %v190
    %v200 = vpop.xlane.xlu0 %199
    %201 = vadd.xlane.f32.xlu0 %v191
    %v202 = vpop.xlane.xlu0 %201
    %203 = vadd.xlane.f32.xlu0 %v192
    %v204 = vpop.xlane.xlu0 %203
    %205 = vadd.xlane.f32.xlu0 %v193
    %v206 = vpop.xlane.xlu0 %205
    %207 = vadd.xlane.f32.xlu0 %v194
    %v208 = vpop.xlane.xlu0 %207
    %209 = vadd.xlane.f32.xlu0 %v195
    %v210 = vpop.xlane.xlu0 %209
    %211 = vadd.xlane.f32.xlu0 %v196
    %v212 = vpop.xlane.xlu0 %211
    %s213 = smul.u32 0, 8
    %v214 = vlaneseq
    %v215 = vand.u32 %v214, 127
    %v216 = vstv %s213
    %v217 = vadd.s32 %v216, %v215
    %vm218 = vcmp.lt.s32.totalorder %v217, 8
    %v227 = vperm.slane %v198, %v215
    %v228 = vperm.slane %v200, %v215
    %v229 = vperm.slane %v202, %v215
    %v230 = vperm.slane %v204, %v215
    %v231 = vperm.slane %v206, %v215
    %v232 = vperm.slane %v208, %v215
    %v233 = vperm.slane %v210, %v215
    %v234 = vperm.slane %v212, %v215
    %vm235 = vcmask 1041409
    %v236 = vsel %vm235, %v228, %v227
    %vm237 = vcmask 1042434
    %v238 = vsel %vm237, %v229, %v236
    %vm239 = vcmask 1043459
    %v240 = vsel %vm239, %v230, %v238
    %vm241 = vcmask 1044484
    %v242 = vsel %vm241, %v231, %v240
    %vm243 = vcmask 1045509
    %v244 = vsel %vm243, %v232, %v242
    %vm245 = vcmask 1046534
    %v246 = vsel %vm245, %v233, %v244
    %vm247 = vcmask 1047559
    %v248 = vsel %vm247, %v234, %v246
    %v250 = vsel %vm218, %v248, -inf
    %v251 = vld [vmem:[#allocation3] sm:$0xff]
    %vm252 = vcmask 64512
    %v253 = vsel %vm252, %v250, -inf
    %254 = vmax.xlane.f32.xlu0 %v253
    %v255 = vpop.xlane.xlu0 %254
    %v256 = vmax.f32 %v251, %v255
    %v257 = vsub.f32 %v251, %v256
    %v258 = vmul.f32 %v257, 1.442695
    %v259 = vpow.pop %v258
    %261 = vset.pattern.permute.xlu0 0
    %262 = vperm.xlu0 %261, %v256
    %v263 = vpop.permute.xlu0 %262
    %v265 = vsub.f32 %v250, %v263
    %v266 = vmul.f32 %v265, 1.442695
    %v267 = vpow.pop %v266
    %v268 = vld [vmem:[#allocation4] sm:$0xff]
    %v269 = vmul.f32 %v259, %v268
    %v270 = vsel %vm252, %v267, 0.0
    %271 = vadd.xlane.f32.xlu0 %v270
    %v272 = vpop.xlane.xlu0 %271
    %v273 = vadd.f32 %v269, %v272
    %vm274 = vcmask 7168
    %275 = vst.msk [vmem:[#allocation4] sm:$0xff] %vm274, %v273
    %v276 = vld [vmem:[#allocation5] sm:$0xff]
    %278 = vset.pattern.permute.xlu0 0
    %279 = vperm.xlu0 %278, %v259
    %v280 = vpop.permute.xlu0 %279
    %v282 = vmul.f32 %v280, %v276
    %v283 = vperm.slane %v267, 0
    %v284 = vlaneseq
    %v285 = vshrl.u32 %v284, 7
    %287 = vset.pattern.permute.xlu0 %v285
    %288 = vperm.xlu0 %287, %v283
    %v289 = vpop.permute.xlu0 %288
    %v290 = vperm.slane %v267, 1
    %v291 = vlaneseq
    %v292 = vshrl.u32 %v291, 7
    %294 = vset.pattern.permute.xlu0 %v292
    %295 = vperm.xlu0 %294, %v290
    %v296 = vpop.permute.xlu0 %295
    %v297 = vperm.slane %v267, 2
    %v298 = vlaneseq
    %v299 = vshrl.u32 %v298, 7
    %301 = vset.pattern.permute.xlu0 %v299
    %302 = vperm.xlu0 %301, %v297
    %v303 = vpop.permute.xlu0 %302
    %v304 = vperm.slane %v267, 3
    %v305 = vlaneseq
    %v306 = vshrl.u32 %v305, 7
    %308 = vset.pattern.permute.xlu0 %v306
    %309 = vperm.xlu0 %308, %v304
    %v310 = vpop.permute.xlu0 %309
    %v311 = vperm.slane %v267, 4
    %v312 = vlaneseq
    %v313 = vshrl.u32 %v312, 7
    %315 = vset.pattern.permute.xlu0 %v313
    %316 = vperm.xlu0 %315, %v311
    %v317 = vpop.permute.xlu0 %316
    %v318 = vperm.slane %v267, 5
    %v319 = vlaneseq
    %v320 = vshrl.u32 %v319, 7
    %322 = vset.pattern.permute.xlu0 %v320
    %323 = vperm.xlu0 %322, %v318
    %v324 = vpop.permute.xlu0 %323
    %v325 = vperm.slane %v267, 6
    %v326 = vlaneseq
    %v327 = vshrl.u32 %v326, 7
    %329 = vset.pattern.permute.xlu0 %v327
    %330 = vperm.xlu0 %329, %v325
    %v331 = vpop.permute.xlu0 %330
    %v332 = vperm.slane %v267, 7
    %v333 = vlaneseq
    %v334 = vshrl.u32 %v333, 7
    %336 = vset.pattern.permute.xlu0 %v334
    %337 = vperm.xlu0 %336, %v332
    %v338 = vpop.permute.xlu0 %337
    %v339 = vmul.f32 %v289, %v136
    %v340 = vmul.f32 %v296, %v137
    %v341 = vmul.f32 %v303, %v138
    %v342 = vmul.f32 %v310, %v139
    %v343 = vmul.f32 %v317, %v140
    %v344 = vmul.f32 %v324, %v141
    %v345 = vmul.f32 %v331, %v142
    %v346 = vmul.f32 %v338, %v143
    %v347 = vrot.slane %v339, 4
    %v348 = vadd.f32 %v339, %v347
    %v349 = vrot.slane %v348, 2
    %v350 = vadd.f32 %v348, %v349
    %v351 = vrot.slane %v350, 1
    %v352 = vadd.f32 %v350, %v351
    %v353 = vrot.slane %v340, 4
    %v354 = vadd.f32 %v340, %v353
    %v355 = vrot.slane %v354, 2
    %v356 = vadd.f32 %v354, %v355
    %v357 = vrot.slane %v356, 1
    %v358 = vadd.f32 %v356, %v357
    %v359 = vrot.slane %v341, 4
    %v360 = vadd.f32 %v341, %v359
    %v361 = vrot.slane %v360, 2
    %v362 = vadd.f32 %v360, %v361
    %v363 = vrot.slane %v362, 1
    %v364 = vadd.f32 %v362, %v363
    %v365 = vrot.slane %v342, 4
    %v366 = vadd.f32 %v342, %v365
    %v367 = vrot.slane %v366, 2
    %v368 = vadd.f32 %v366, %v367
    %v369 = vrot.slane %v368, 1
    %v370 = vadd.f32 %v368, %v369
    %v371 = vrot.slane %v343, 4
    %v372 = vadd.f32 %v343, %v371
    %v373 = vrot.slane %v372, 2
    %v374 = vadd.f32 %v372, %v373
    %v375 = vrot.slane %v374, 1
    %v376 = vadd.f32 %v374, %v375
    %v377 = vrot.slane %v344, 4
    %v378 = vadd.f32 %v344, %v377
    %v379 = vrot.slane %v378, 2
    %v380 = vadd.f32 %v378, %v379
    %v381 = vrot.slane %v380, 1
    %v382 = vadd.f32 %v380, %v381
    %v383 = vrot.slane %v345, 4
    %v384 = vadd.f32 %v345, %v383
    %v385 = vrot.slane %v384, 2
    %v386 = vadd.f32 %v384, %v385
    %v387 = vrot.slane %v386, 1
    %v388 = vadd.f32 %v386, %v387
    %v389 = vrot.slane %v346, 4
    %v390 = vadd.f32 %v346, %v389
    %v391 = vrot.slane %v390, 2
    %v392 = vadd.f32 %v390, %v391
    %v393 = vrot.slane %v392, 1
    %v394 = vadd.f32 %v392, %v393
    %v403 = vsel %vm235, %v358, %v352
    %v404 = vsel %vm237, %v364, %v403
    %v405 = vsel %vm239, %v370, %v404
    %v406 = vsel %vm241, %v376, %v405
    %v407 = vsel %vm243, %v382, %v406
    %v408 = vsel %vm245, %v388, %v407
    %v409 = vsel %vm247, %v394, %v408
    %v411 = vadd.f32 %v282, %v409
    %412 = vst [vmem:[#allocation5] sm:$0xff] %v411
    %413 = vst.msk [vmem:[#allocation3] sm:$0xff] %vm274, %v256
    // Predicated region
    $region42: #{tpu_custom_call.1} parent=1 // pred_check
      %p414 = pneg %p82
    $region43: #{tpu_custom_call.1} parent=1 // pred_check_branch
      %416 = sbr.rel (%p414) target = $region45
    $region44: #{tpu_custom_call.1} parent=1 // pred_region
      %v417 = vld [vmem:[#allocation4] sm:$0xff]
      %v418 = vrcp.pop %v417
      %v419 = vld [vmem:[#allocation5] sm:$0xff]
      %421 = vset.pattern.permute.xlu0 0
      %422 = vperm.xlu0 %421, %v418
      %v423 = vpop.permute.xlu0 %422
      %v425 = vmul.f32 %v419, %v423
      %426 = vst [vmem:[#allocation14] sm:$0xff] %v425
    $region45: #{tpu_custom_call.1} parent=1 // pred_fallthru
      _
    // Predicated region
    $region46: #{tpu_custom_call.1} parent=1 // pred_check
      _
    $region47: #{tpu_custom_call.1} parent=1 // pred_check_branch
      %428 = sbr.rel (0) target = $region49
    $region48: #{tpu_custom_call.1} parent=1 // pred_region
      %430 = vsyncadd [#allocation8], 0
      %s432 = sshll.u32 [#allocation14], 4
      %s433 = int_to_ptr.vmem [resolvable:$true] %s432
      %s434 = sshll.u32 %s5, 4
      %s435 = int_to_ptr.hbm [resolvable:$true] %s434
      %437 = dma.vmem_to_hbm [thread:$0]  %s433, 128, %s435, [#allocation8]
    $region49: #{tpu_custom_call.1} parent=1 // pred_fallthru
      _
    // Predicated region
    $region50: #{tpu_custom_call.1} parent=1 // pred_check
      _
    $region51: #{tpu_custom_call.1} parent=1 // pred_check_branch
      %439 = sbr.rel (0) target = $region53
    $region52: #{tpu_custom_call.1} parent=1 // pred_region
      %441 = dma.done [#allocation8], 128
    $region53: #{tpu_custom_call.1} parent=1 // pred_fallthru
      _
    %442 = vsyncpa [#allocation7], 1
    %443 = vsyncpa [#allocation10], 1
    %444 = vsyncpa [#allocation13], 1
    %445 = vsyncpa [#allocation8], 1

</llo_original>
